<compile_context>
chip_gen: v5e
topology: v5e:2x2
jax: 0.10.0
libtpu: 0.0.40
codegen_flags: <defaults>
</compile_context>

<pallas_src>
import functools
from typing import NamedTuple

import jax
import jax.numpy as jnp
from jax.experimental import pallas as pl
from jax.experimental.pallas import tpu as pltpu


# --- activation dictionary (mirrors act_dict in the PyTorch module) ----------
ACTS = {
    "linear": lambda x: x,
    "sigmoid": jax.nn.sigmoid,
    "relu": lambda x: jnp.maximum(x, 0.0),
    "tanh": jnp.tanh,
}

_TB_CAP = 2048  # max batch-tile rows; ~1 MiB out tile @ D_pad=128, VMEM-safe on all gens


def _round_up(n, m):
    return ((n + m - 1) // m) * m


class NCAPacked(NamedTuple):
    """Pre-packed (lane-padded) NCA parameters, built once and reused."""
    w_slab: jax.Array      # [L, D_pad, D_pad] f32, zero-padded
    b_slab: jax.Array      # [L, 1, D_pad]     f32, zero-padded
    input_size: int
    output_size: int
    d_pad: int
    in_k: int              # input_size rounded up to a multiple of 8


def pack_nca_params(weights, biases):
    """Pack per-layer [in_i, out_i] weights / [out_i] biases into padded slabs.

    Call ONCE after (re)initializing or mutating parameters; the returned
    device arrays are reused by every nca_forward call.
    """
    n_layers = len(weights)
    assert len(biases) == n_layers and n_layers >= 1
    input_size = weights[0].shape[0]
    output_size = weights[-1].shape[1]

    dims = [input_size] + [w.shape[1] for w in weights]
    d_pad = _round_up(max(dims), 128)
    in_k = _round_up(input_size, 8)

    w_slab = jnp.zeros((n_layers, d_pad, d_pad), jnp.float32)
    b_slab = jnp.zeros((n_layers, 1, d_pad), jnp.float32)
    for i, (w, b) in enumerate(zip(weights, biases)):
        fi, fo = w.shape
        w_slab = w_slab.at[i, :fi, :fo].set(w.astype(jnp.float32))
        b_slab = b_slab.at[i, 0, :fo].set(b.astype(jnp.float32))

    w_slab = jax.device_put(w_slab)
    b_slab = jax.device_put(b_slab)
    return NCAPacked(w_slab, b_slab, input_size, output_size, d_pad, in_k)


def _pick_batch_tile(batch):
    """Largest sublane-aligned tile under the VMEM-safe cap, preferring >= 2
    grid steps so both v7x TensorCores are used when the batch allows."""
    b8 = _round_up(batch, 8)
    if b8 <= 16:
        return b8                              # tiny batch: single step
    if b8 <= 2 * _TB_CAP:
        return _round_up(-(-b8 // 2), 8)       # exactly 2 parallel steps
    return _TB_CAP                             # large batch: capped tile, >2 steps


def _nca_kernel(acts, in_k, x_ref, w_ref, b_ref, out_ref):
    """x_ref: [TB, in_k], w_ref: [L, D_pad, D_pad], b_ref: [L, 1, D_pad]."""
    h = x_ref[...]  # f32, [TB, in_k]
    for i, act in enumerate(acts):
        if i == 0:
            w = w_ref[0, :in_k, :]   # static slice: contract only real input rows
        else:
            w = w_ref[i]             # full padded weight (zero rows annihilate pad)
        h = jnp.dot(h, w, preferred_element_type=jnp.float32) + b_ref[i]
        h = ACTS[act](h)
    out_ref[...] = h.astype(out_ref.dtype)


def nca_forward(x, params: NCAPacked, acts):
    """Run the NCA MLP forward pass in a single Pallas kernel.

    x:      [input_size] or [B, input_size] float32
    params: NCAPacked from pack_nca_params (built once, reused)
    acts:   list/tuple of activation names, one per layer
    """
    assert len(acts) == params.w_slab.shape[0]

    single = x.ndim == 1
    xb = (x[None, :] if single else x).astype(jnp.float32)
    B, in_size = xb.shape
    assert in_size == params.input_size

    # Zero-extend input lanes to a multiple of 8 (usually a no-op).
    if params.in_k != in_size:
        xb = jnp.pad(xb, ((0, 0), (0, params.in_k - in_size)))

    # Batch tiling (rows only; last dim stays at native width).
    tb = _pick_batch_tile(B)
    b_pad = _round_up(B, tb)
    if b_pad != B:
        xb = jnp.pad(xb, ((0, b_pad - B), (0, 0)))

    grid = (b_pad // tb,)
    kernel = functools.partial(_nca_kernel, tuple(acts), params.in_k)
    n_layers = params.w_slab.shape[0]
    d_pad = params.d_pad

    out = pl.pallas_call(
        kernel,
        out_shape=jax.ShapeDtypeStruct((b_pad, d_pad), jnp.float32),
        grid=grid,
        in_specs=[
            pl.BlockSpec((tb, params.in_k), lambda b: (b, 0)),             # x tile
            pl.BlockSpec((n_layers, d_pad, d_pad), lambda b: (0, 0, 0)),   # weights (resident)
            pl.BlockSpec((n_layers, 1, d_pad), lambda b: (0, 0, 0)),       # biases  (resident)
        ],
        out_specs=pl.BlockSpec((tb, d_pad), lambda b: (b, 0)),
        compiler_params=pltpu.CompilerParams(
            dimension_semantics=("parallel",)),
    )(xb, params.w_slab, params.b_slab)

    out = out[:B, :params.output_size]
    return out[0] if single else out


def init_nca_params(key, input_size, output_size, hidden_layer_sizes):
    """Deterministic init matching nn.Linear's default U(-1/sqrt(fan_in), ...)."""
    if len(hidden_layer_sizes) == 0:
        dims = [(input_size, output_size)]
    else:
        dims = [(input_size, hidden_layer_sizes[0])]
        for i in range(1, len(hidden_layer_sizes)):
            dims.append((hidden_layer_sizes[i - 1], hidden_layer_sizes[i]))
        dims.append((hidden_layer_sizes[-1], output_size))

    weights, biases = [], []
    for fan_in, fan_out in dims:
        key, kw, kb = jax.random.split(key, 3)
        bound = 1.0 / jnp.sqrt(jnp.float32(fan_in))
        # stored as [in, out] (transpose of torch's [out, in]) for x @ W
        weights.append(jax.random.uniform(kw, (fan_in, fan_out), jnp.float32,
                                          minval=-bound, maxval=bound))
        biases.append(jax.random.uniform(kb, (fan_out,), jnp.float32,
                                         minval=-bound, maxval=bound))
    return weights, biases


def nca_reference(x, weights, biases, acts):
    """Pure-JAX reference of the same forward pass (for correctness check)."""
    h = x.astype(jnp.float32)
    for w, b, a in zip(weights, biases, acts):
        h = ACTS[a](h @ w + b)
    return h


if __name__ == "__main__":
    # Small NCA: input 16 -> hidden [32, 32] -> output 8
    input_size = 16
    hidden_layer_sizes = [32, 32]
    output_size = 8
    acts = ["relu", "tanh", "sigmoid"]  # one activation per layer

    key = jax.random.PRNGKey(0)
    key, kx = jax.random.split(key)

    weights, biases = init_nca_params(key, input_size, output_size,
                                      hidden_layer_sizes)
    # Pack ONCE; reused across every forward call below.
    packed = pack_nca_params(weights, biases)

    # Batched run: tb=128 -> 2 parallel grid steps (both TCs on v7x).
    B = 256
    xb = jax.random.normal(kx, (B, input_size), jnp.float32)
    outb = jax.block_until_ready(nca_forward(xb, packed, acts))
    refb = nca_reference(xb, weights, biases, acts)
    assert outb.shape == (B, output_size)
    assert jnp.allclose(outb, refb, atol=1e-5, rtol=1e-5)

    # Second call reuses the cached slabs (no per-call repacking).
    outb2 = jax.block_until_ready(nca_forward(xb, packed, acts))
    assert jnp.allclose(outb2, refb, atol=1e-5, rtol=1e-5)

    # Single-vector run (matches the original module's forward(list[float])).
    x1 = xb[0]
    out1 = jax.block_until_ready(nca_forward(x1, packed, acts))
    assert out1.shape == (output_size,)
    assert jnp.allclose(out1, refb[0], atol=1e-5, rtol=1e-5)

    # TODO(synk): host-side mutation/persistence helpers of the torch module
    # (add_to_weight, set_bias, save/load, ...) are parameter bookkeeping, not
    # kernel ops; mutate the raw weights/biases and re-run pack_nca_params.
    print("KERNEL_OK")
</pallas_src>

<mosaic_0001>
module attributes {stable_mosaic.version = 11 : i64} {
  func.func @_nca_kernel(%arg0: i32, %arg1: memref<128x16xf32, #tpu.memory_space<vmem>>, %arg2: memref<3x128x128xf32, #tpu.memory_space<vmem>>, %arg3: memref<3x1x128xf32, #tpu.memory_space<vmem>>, %arg4: memref<128x128xf32, #tpu.memory_space<vmem>>) attributes {dimension_semantics = [#tpu.dimension_semantics<parallel>], iteration_bounds = array<i64: 2>, scalar_prefetch = 0 : i64, scratch_operands = 0 : i64, tpu.core_type = #tpu.core_type<tc>, window_params = [{transform_indices = @transform_0, window_bounds = array<i64: 128, 16>}, {pipeline_mode = #tpu.pipeline_mode<synchronous>, transform_indices = @transform_1, window_bounds = array<i64: 3, 128, 128>}, {pipeline_mode = #tpu.pipeline_mode<synchronous>, transform_indices = @transform_2, window_bounds = array<i64: 3, 1, 128>}, {transform_indices = @transform_3, window_bounds = array<i64: 128, 128>}]} {
    %c0 = arith.constant 0 : index
    %c0_0 = arith.constant 0 : index
    %0 = vector.load %arg1[%c0, %c0_0] : memref<128x16xf32, #tpu.memory_space<vmem>>, vector<128x16xf32>
    %c0_1 = arith.constant 0 : index
    %c0_2 = arith.constant 0 : index
    %c0_3 = arith.constant 0 : index
    %1 = vector.load %arg2[%c0_1, %c0_2, %c0_3] : memref<3x128x128xf32, #tpu.memory_space<vmem>>, vector<1x16x128xf32>
    %2 = vector.shape_cast %1 : vector<1x16x128xf32> to vector<16x128xf32>
    %cst = arith.constant dense<0.000000e+00> : vector<128x128xf32>
    %3 = tpu.matmul %0, %2, %cst {dimension_numbers = #tpu.dot_dimension_numbers<[1], [0], [0], [1], [0, 0, 1, 1], [], []>} : vector<128x16xf32>, vector<16x128xf32>, vector<128x128xf32> -> vector<128x128xf32>
    %c0_4 = arith.constant 0 : index
    %c0_5 = arith.constant 0 : index
    %c0_6 = arith.constant 0 : index
    %4 = vector.load %arg3[%c0_4, %c0_5, %c0_6] : memref<3x1x128xf32, #tpu.memory_space<vmem>>, vector<1x1x128xf32>
    %5 = vector.shape_cast %4 : vector<1x1x128xf32> to vector<1x128xf32>
    %6 = vector.broadcast %5 : vector<1x128xf32> to vector<128x128xf32>
    %7 = arith.addf %3, %6 : vector<128x128xf32>
    %cst_7 = arith.constant 0.000000e+00 : f32
    %8 = vector.broadcast %cst_7 : f32 to vector<128x128xf32>
    %9 = arith.maximumf %7, %8 : vector<128x128xf32>
    %c1 = arith.constant 1 : index
    %c0_8 = arith.constant 0 : index
    %c0_9 = arith.constant 0 : index
    %10 = vector.load %arg2[%c1, %c0_8, %c0_9] : memref<3x128x128xf32, #tpu.memory_space<vmem>>, vector<1x128x128xf32>
    %11 = vector.shape_cast %10 : vector<1x128x128xf32> to vector<128x128xf32>
    %cst_10 = arith.constant dense<0.000000e+00> : vector<128x128xf32>
    %12 = tpu.matmul %9, %11, %cst_10 {dimension_numbers = #tpu.dot_dimension_numbers<[1], [0], [0], [1], [0, 0, 1, 1], [], []>} : vector<128x128xf32>, vector<128x128xf32>, vector<128x128xf32> -> vector<128x128xf32>
    %c1_11 = arith.constant 1 : index
    %c0_12 = arith.constant 0 : index
    %c0_13 = arith.constant 0 : index
    %13 = vector.load %arg3[%c1_11, %c0_12, %c0_13] : memref<3x1x128xf32, #tpu.memory_space<vmem>>, vector<1x1x128xf32>
    %14 = vector.shape_cast %13 : vector<1x1x128xf32> to vector<1x128xf32>
    %15 = vector.broadcast %14 : vector<1x128xf32> to vector<128x128xf32>
    %16 = arith.addf %12, %15 : vector<128x128xf32>
    %17 = math.tanh %16 : vector<128x128xf32>
    %c2 = arith.constant 2 : index
    %c0_14 = arith.constant 0 : index
    %c0_15 = arith.constant 0 : index
    %18 = vector.load %arg2[%c2, %c0_14, %c0_15] : memref<3x128x128xf32, #tpu.memory_space<vmem>>, vector<1x128x128xf32>
    %19 = vector.shape_cast %18 : vector<1x128x128xf32> to vector<128x128xf32>
    %cst_16 = arith.constant dense<0.000000e+00> : vector<128x128xf32>
    %20 = tpu.matmul %17, %19, %cst_16 {dimension_numbers = #tpu.dot_dimension_numbers<[1], [0], [0], [1], [0, 0, 1, 1], [], []>} : vector<128x128xf32>, vector<128x128xf32>, vector<128x128xf32> -> vector<128x128xf32>
    %c2_17 = arith.constant 2 : index
    %c0_18 = arith.constant 0 : index
    %c0_19 = arith.constant 0 : index
    %21 = vector.load %arg3[%c2_17, %c0_18, %c0_19] : memref<3x1x128xf32, #tpu.memory_space<vmem>>, vector<1x1x128xf32>
    %22 = vector.shape_cast %21 : vector<1x1x128xf32> to vector<1x128xf32>
    %23 = vector.broadcast %22 : vector<1x128xf32> to vector<128x128xf32>
    %24 = arith.addf %20, %23 : vector<128x128xf32>
    %25 = arith.negf %24 : vector<128x128xf32>
    %26 = math.exp %25 : vector<128x128xf32>
    %cst_20 = arith.constant 1.000000e+00 : f32
    %27 = vector.broadcast %cst_20 : f32 to vector<128x128xf32>
    %28 = arith.addf %27, %26 : vector<128x128xf32>
    %29 = arith.divf %27, %28 : vector<128x128xf32>
    %c0_21 = arith.constant 0 : index
    %c0_22 = arith.constant 0 : index
    %30 = vector.load %arg4[%c0_21, %c0_22] : memref<128x128xf32, #tpu.memory_space<vmem>>, vector<128x128xf32>
    tpu.vector_store %arg4[%c0_21, %c0_22], %29 {strides = array<i32>} : memref<128x128xf32, #tpu.memory_space<vmem>>, vector<128x128xf32>,
    return
  }
  func.func @transform_0(%arg0: i32) -> (i32, i32) {
    %c0_i32 = arith.constant 0 : i32
    %c0_i32_0 = arith.constant 0 : i32
    return %arg0, %c0_i32 : i32, i32
  }
  func.func @transform_1(%arg0: i32) -> (i32, i32, i32) {
    %c0_i32 = arith.constant 0 : i32
    %c0_i32_0 = arith.constant 0 : i32
    %c0_i32_1 = arith.constant 0 : i32
    %c0_i32_2 = arith.constant 0 : i32
    return %c0_i32, %c0_i32_0, %c0_i32_1 : i32, i32, i32
  }
  func.func @transform_2(%arg0: i32) -> (i32, i32, i32) {
    %c0_i32 = arith.constant 0 : i32
    %c0_i32_0 = arith.constant 0 : i32
    %c0_i32_1 = arith.constant 0 : i32
    %c0_i32_2 = arith.constant 0 : i32
    return %c0_i32, %c0_i32_0, %c0_i32_1 : i32, i32, i32
  }
  func.func @transform_3(%arg0: i32) -> (i32, i32) {
    %c0_i32 = arith.constant 0 : i32
    %c0_i32_0 = arith.constant 0 : i32
    return %arg0, %c0_i32 : i32, i32
  }
}

</mosaic_0001>

<llo_original>
// kernel: tpu_custom_call.1
$region0: #{tpu_custom_call.1}
  #allocation0 [shape = 'u32[]', space=smem, size = 0x4, offset = 0x4, fixed_abs, tag = 'smem constant byte address 0x4 - core index']
  #allocation1 [shape = 'u32[72,128]{1,0:T(1,128)}', space=vmem, size = 0x9000, scoped, tag = 'internal scratch']
  %s0 = inlined_call_operand.vmem [shape: f32[256,16], index: 0, kind: input, shape index: {}]
  %s1 = inlined_call_operand.hbm [shape: f32[3,128,128], index: 1, kind: input, shape index: {}]
  %s2 = inlined_call_operand.vmem [shape: f32[3,1,128], index: 2, kind: input, shape index: {}]
  %s3 = inlined_call_operand.hbm [shape: f32[256,128], index: 3, kind: output, shape index: {}]
  %s4 = sld [smem:[#allocation0]]
  $region49: #{tpu_custom_call.1} parent=0
    _
  %s6 = ssub.s32 1, %s4
  %s7 = scalar_select 0, %s6, %s4
  $region1: #{tpu_custom_call.1} parent=0
    #allocation2 [shape = 'u8[196608]{0}', space=vmem, size = 0x30000, scoped, tag = 'input window, operand 1, single buffered']
    #allocation3 [shape = 's32[2]{0}', space=sflag, size = 0x8, scoped, tag = 'scoped memory for tpu_custom_call.1']
    #allocation4 [shape = 's32[2]{0}', space=sflag, size = 0x8, scoped, tag = 'scoped memory for tpu_custom_call.1']
    #allocation5 [shape = 'u8[131072]{0}', space=vmem, size = 0x20000, scoped, tag = 'output window, operand 0']
    %8 = vsyncpa [#allocation3], 0
    %9 = vsyncpa [#allocation4], 0
    %s10 = scalar_lea.sflag [#allocation4], 1
    %11 = vsyncpa %s10, 0
    loop: start=0, step=1, limit=4
    $region2: #{tpu_custom_call.1} parent=1 // loop_pre_header
      _
    $region3: #{tpu_custom_call.1} parent=1 // loop_header
      %s13 = sphi 0, %s17
      %p14 = scmp.ge.s32.totalorder %s13, 4
      %s23 = sphi 0, %s25
      %s26 = sphi 0, %s23
      %s27 = sphi 0, %s26
      %s43 = sphi 0, %s27
      %s47 = sphi 0, %s47
      %s49 = sphi 0, %s47
      %s50 = sphi 0, %s49
      %s64 = sphi 0, %s50
      %s68 = sphi 0, %s68
      %s70 = sphi 0, %s68
      %s71 = sphi 0, %s70
      %s85 = sphi 0, %s71
      %s91 = sphi 0, %s93
      %s94 = sphi 0, %s91
      %s95 = sphi 0, %s94
      %s111 = sphi 0, %s95
    $region4: #{tpu_custom_call.1} parent=1 // loop_header_branch
      %16 = sbr.rel (%p14) target = $region8
    $region5: #{tpu_custom_call.1} parent=1 // loop_body
      %s18 = ssub.s32 %s13, 1
      %s19 = ssub.s32 %s13, 2
      %s20 = sadd.s32 %s13, 1
      %s21 = ssub.s32 %s13, %s20
      %p22 = scmp.eq.s32.totalorder %s21, 0
      %s24 = sadd.s32 %s23, 1
      %s25 = scalar_select %p22, %s23, %s24
      %p28 = pneg %p22
      %p29 = scmp.eq.s32.totalorder %s13, 1
      %p30 = por %p28, %p29
      %p31 = scmp.ne.s32.totalorder %s23, %s26
      %p32 = scmp.eq.s32.totalorder %s13, 0
      %p33 = por %p31, %p32
      %p34 = scmp.ne.s32.totalorder %s23, %s26
      %p35 = scmp.eq.s32.totalorder %s18, 1
      %p36 = por %p34, %p35
      %p37 = scmp.ne.s32.totalorder %s26, %s27
      %p38 = scmp.eq.s32.totalorder %s18, 0
      %p39 = por %p37, %p38
      %p40 = scmp.ne.s32.totalorder %s26, %s27
      %p41 = scmp.eq.s32.totalorder %s19, 1
      %p42 = por %p40, %p41
      %p44 = scmp.ne.s32.totalorder %s27, %s43
      %p45 = scmp.eq.s32.totalorder %s19, 0
      %p46 = por %p44, %p45
      %s48 = sadd.s32 %s47, 1
      %p51 = scmp.eq.s32.totalorder %s13, 1
      %p52 = scmp.ne.s32.totalorder %s47, %s49
      %p53 = scmp.eq.s32.totalorder %s13, 0
      %p54 = por %p52, %p53
      %p55 = scmp.ne.s32.totalorder %s47, %s49
      %p56 = scmp.eq.s32.totalorder %s18, 1
      %p57 = por %p55, %p56
      %p58 = scmp.ne.s32.totalorder %s49, %s50
      %p59 = scmp.eq.s32.totalorder %s18, 0
      %p60 = por %p58, %p59
      %p61 = scmp.ne.s32.totalorder %s49, %s50
      %p62 = scmp.eq.s32.totalorder %s19, 1
      %p63 = por %p61, %p62
      %p65 = scmp.ne.s32.totalorder %s50, %s64
      %p66 = scmp.eq.s32.totalorder %s19, 0
      %p67 = por %p65, %p66
      %s69 = sadd.s32 %s68, 1
      %p72 = scmp.eq.s32.totalorder %s13, 1
      %p73 = scmp.ne.s32.totalorder %s68, %s70
      %p74 = scmp.eq.s32.totalorder %s13, 0
      %p75 = por %p73, %p74
      %p76 = scmp.ne.s32.totalorder %s68, %s70
      %p77 = scmp.eq.s32.totalorder %s18, 1
      %p78 = por %p76, %p77
      %p79 = scmp.ne.s32.totalorder %s70, %s71
      %p80 = scmp.eq.s32.totalorder %s18, 0
      %p81 = por %p79, %p80
      %p82 = scmp.ne.s32.totalorder %s70, %s71
      %p83 = scmp.eq.s32.totalorder %s19, 1
      %p84 = por %p82, %p83
      %p86 = scmp.ne.s32.totalorder %s71, %s85
      %p87 = scmp.eq.s32.totalorder %s19, 0
      %p88 = por %p86, %p87
      %s89 = ssub.s32 %s13, %s20
      %p90 = scmp.eq.s32.totalorder %s89, 0
      %s92 = sadd.s32 %s91, 1
      %s93 = scalar_select %p90, %s91, %s92
      %p96 = pneg %p90
      %p97 = scmp.eq.s32.totalorder %s13, 1
      %p98 = por %p96, %p97
      %p99 = scmp.ne.s32.totalorder %s91, %s94
      %p100 = scmp.eq.s32.totalorder %s13, 0
      %p101 = por %p99, %p100
      %p102 = scmp.ne.s32.totalorder %s91, %s94
      %p103 = scmp.eq.s32.totalorder %s18, 1
      %p104 = por %p102, %p103
      %p105 = scmp.ne.s32.totalorder %s94, %s95
      %p106 = scmp.eq.s32.totalorder %s18, 0
      %p107 = por %p105, %p106
      %p108 = scmp.ne.s32.totalorder %s94, %s95
      %p109 = scmp.eq.s32.totalorder %s19, 1
      %p110 = por %p108, %p109
      %p112 = scmp.ne.s32.totalorder %s95, %s111
      %p113 = scmp.eq.s32.totalorder %s19, 0
      %p114 = por %p112, %p113
      %p115 = scmp.le.s32.totalorder 1, %s13
      %p116 = scmp.lt.s32.totalorder %s13, 3
      %p117 = pnand %p115, %p116
      %p118 = pneg %p117
      // Predicated region
      $region9: #{tpu_custom_call.1} parent=5 // pred_check
        _
      $region10: #{tpu_custom_call.1} parent=5 // pred_check_branch
        %120 = sbr.rel (%p117) target = $region12
      $region11: #{tpu_custom_call.1} parent=5 // pred_region
        %s121 = ssub.s32 %s13, 1
        // Predicated region
        $region13: #{tpu_custom_call.1} parent=11 // pred_check
          %p122 = pneg %p60
        $region14: #{tpu_custom_call.1} parent=11 // pred_check_branch
          %124 = sbr.rel (%p122) target = $region16
        $region15: #{tpu_custom_call.1} parent=11 // pred_region
          %126 = vsyncadd [#allocation3], 0
          %s127 = sshll.u32 %s1, 4
          %s128 = int_to_ptr.hbm [resolvable:$true] %s127
          %s129 = sshll.u32 [#allocation2], 4
          %s130 = int_to_ptr.vmem [resolvable:$true] %s129
          %135 = dma.hbm_to_vmem [thread:$0]  %s128, 6144, %s130, [#allocation3], 128, 128, 8
        $region16: #{tpu_custom_call.1} parent=11 // pred_fallthru
          _
        // Predicated region
        $region17: #{tpu_custom_call.1} parent=11 // pred_check
          %p136 = pneg %p81
        $region18: #{tpu_custom_call.1} parent=11 // pred_check_branch
          %138 = sbr.rel (%p136) target = $region20
        $region19: #{tpu_custom_call.1} parent=11 // pred_region
          _
        $region20: #{tpu_custom_call.1} parent=11 // pred_fallthru
          _
      $region12: #{tpu_custom_call.1} parent=5 // pred_fallthru
        _
      %p139 = scmp.lt.s32.totalorder %s13, 2
      // Predicated region
      $region21: #{tpu_custom_call.1} parent=5 // pred_check
        %p140 = pneg %p139
      $region22: #{tpu_custom_call.1} parent=5 // pred_check_branch
        %142 = sbr.rel (%p140) target = $region24
      $region23: #{tpu_custom_call.1} parent=5 // pred_region
        // Predicated region
        $region25: #{tpu_custom_call.1} parent=23 // pred_check
          %p143 = pneg %p33
        $region26: #{tpu_custom_call.1} parent=23 // pred_check_branch
          %145 = sbr.rel (%p143) target = $region28
        $region27: #{tpu_custom_call.1} parent=23 // pred_region
          %s146 = smul.u32 16, %s13
          %p147 = scmp.lt.s32.totalorder %s146, 31
          %s148 = scalar_select %p147, %s146, 31
          %s149 = smul.addr %s148, 8
          %s150 = scalar_lea.vmem %s0, %s149
          %s151 = smul.u32 16, %s13
        $region28: #{tpu_custom_call.1} parent=23 // pred_fallthru
          _
      $region24: #{tpu_custom_call.1} parent=5 // pred_fallthru
        _
      %p152 = scmp.le.s32.totalorder 1, %s13
      %p153 = scmp.lt.s32.totalorder %s13, 3
      %p154 = pnand %p152, %p153
      %p155 = pneg %p154
      // Predicated region
      $region29: #{tpu_custom_call.1} parent=5 // pred_check
        _
      $region30: #{tpu_custom_call.1} parent=5 // pred_check_branch
        %157 = sbr.rel (%p154) target = $region32
      $region31: #{tpu_custom_call.1} parent=5 // pred_region
        %s158 = ssub.s32 %s13, 1
        // Predicated region
        $region33: #{tpu_custom_call.1} parent=31 // pred_check
          %p159 = pneg %p60
        $region34: #{tpu_custom_call.1} parent=31 // pred_check_branch
          %161 = sbr.rel (%p159) target = $region36
        $region35: #{tpu_custom_call.1} parent=31 // pred_region
          %163 = dma.done [#allocation3], 6144
        $region36: #{tpu_custom_call.1} parent=31 // pred_fallthru
          _
        %s164 = smul.u32 16, %s18
        %p165 = scmp.lt.s32.totalorder %s164, 31
        %s166 = scalar_select %p165, %s164, 31
        %s167 = smul.addr %s166, 8
        %s168 = scalar_lea.vmem %s0, %s167
        %p169 = pneg %p39
        %p170 = pneg %p36
        %p171 = pneg %p60
        %p172 = pneg %p57
        %p173 = pneg %p81
        %p174 = pneg %p78
        %p175 = pneg %p107
        %p176 = pneg %p104
        %s177 = sand.u32 %s94, 1
        %s178 = scalar_lea.sflag [#allocation4], %s177
        %s179 = sand.u32 %s94, 1
        %s180 = smul.addr %s179, 128
        %s181 = scalar_lea.vmem [#allocation5], %s180
        %s182 = smul.u32 16, %s18
        %p183 = scmp.lt.s32.totalorder %s182, 31
        %s184 = scalar_select %p183, %s182, 31
        %s185 = smul.addr %s184, 8
        %s186 = scalar_lea.vmem %s0, %s185
        %s187 = smul.u32 16, %s18
        %s188 = smul.u32 16, %s18
        %v189 = vld [vmem:[%s186] sm:$0xff]
        %v190 = vld [vmem:[%s186 + $0x8] sm:$0xff]
        %v191 = vld [vmem:[%s186 + $0x10] sm:$0xff]
        %v192 = vld [vmem:[%s186 + $0x18] sm:$0xff]
        %v193 = vld [vmem:[%s186 + $0x20] sm:$0xff]
        %v194 = vld [vmem:[%s186 + $0x28] sm:$0xff]
        %v195 = vld [vmem:[%s186 + $0x30] sm:$0xff]
        %v196 = vld [vmem:[%s186 + $0x38] sm:$0xff]
        %v197 = vld [vmem:[%s186 + $0x40] sm:$0xff]
        %v198 = vld [vmem:[%s186 + $0x48] sm:$0xff]
        %v199 = vld [vmem:[%s186 + $0x50] sm:$0xff]
        %v200 = vld [vmem:[%s186 + $0x58] sm:$0xff]
        %v201 = vld [vmem:[%s186 + $0x60] sm:$0xff]
        %v202 = vld [vmem:[%s186 + $0x68] sm:$0xff]
        %v203 = vld [vmem:[%s186 + $0x70] sm:$0xff]
        %v204 = vld [vmem:[%s186 + $0x78] sm:$0xff]
        %v205 = vld [vmem:[#allocation2] sm:$0xff]
        %v206 = vld [vmem:[#allocation2 + $0x8] sm:$0xff]
        %v207 = vld [vmem:[%s2] sm:$0x1]
        %v209 = vperm.slane %v207, 0
        %vm211 = vcmask 130048
        %v213 = vsel %vm211, %v189, 0
        %v216 = vsel %vm211, %v190, 0
        %v219 = vsel %vm211, %v191, 0
        %v222 = vsel %vm211, %v192, 0
        %v225 = vsel %vm211, %v193, 0
        %v228 = vsel %vm211, %v194, 0
        %v231 = vsel %vm211, %v195, 0
        %v234 = vsel %vm211, %v196, 0
        %v237 = vsel %vm211, %v197, 0
        %v240 = vsel %vm211, %v198, 0
        %v243 = vsel %vm211, %v199, 0
        %v246 = vsel %vm211, %v200, 0
        %v249 = vsel %vm211, %v201, 0
        %v252 = vsel %vm211, %v202, 0
        %v255 = vsel %vm211, %v203, 0
        %v258 = vsel %vm211, %v204, 0
        %260 = vmatpush.msra.mxu0 0.0
        %261 = vmatpush.msra.mxu0 0.0
        %262 = vmatpush.msra.mxu0 0.0
        %263 = vmatpush.msra.mxu0 0.0
        %264 = vmatpush.msra.mxu0 0.0
        %265 = vmatpush.msra.mxu0 0.0
        %266 = vmatpush.msra.mxu0 0.0
        %267 = vmatpush.msra.mxu0 0.0
        %268 = vmatpush.msra.mxu0 0.0
        %269 = vmatpush.msra.mxu0 0.0
        %270 = vmatpush.msra.mxu0 0.0
        %271 = vmatpush.msra.mxu0 0.0
        %272 = vmatpush.msra.mxu0 0.0
        %273 = vmatpush.msra.mxu0 0.0
        %274 = vmatpush.msra.mxu0 %v206
        %275 = vmatpush.msra.mxu0 %v205
        %276 = vmatmul.f32.gmra.mxu0 %v213
        %v277 = vpop.f32.mrf.mxu0
        %v278 = vadd.f32 %v209, %v277
        %279 = vmatmul.f32.gmra.mxu0 %v216
        %v280 = vpop.f32.mrf.mxu0
        %v281 = vadd.f32 %v209, %v280
        %282 = vmatmul.f32.gmra.mxu0 %v219
        %v283 = vpop.f32.mrf.mxu0
        %v284 = vadd.f32 %v209, %v283
        %285 = vmatmul.f32.gmra.mxu0 %v222
        %v286 = vpop.f32.mrf.mxu0
        %v287 = vadd.f32 %v209, %v286
        %288 = vmatmul.f32.gmra.mxu0 %v225
        %v289 = vpop.f32.mrf.mxu0
        %v290 = vadd.f32 %v209, %v289
        %291 = vmatmul.f32.gmra.mxu0 %v228
        %v292 = vpop.f32.mrf.mxu0
        %v293 = vadd.f32 %v209, %v292
        %294 = vmatmul.f32.gmra.mxu0 %v231
        %v295 = vpop.f32.mrf.mxu0
        %v296 = vadd.f32 %v209, %v295
        %297 = vmatmul.f32.gmra.mxu0 %v234
        %v298 = vpop.f32.mrf.mxu0
        %v299 = vadd.f32 %v209, %v298
        %300 = vmatmul.f32.gmra.mxu0 %v237
        %v301 = vpop.f32.mrf.mxu0
        %v302 = vadd.f32 %v209, %v301
        %303 = vmatmul.f32.gmra.mxu0 %v240
        %v304 = vpop.f32.mrf.mxu0
        %v305 = vadd.f32 %v209, %v304
        %306 = vmatmul.f32.gmra.mxu0 %v243
        %v307 = vpop.f32.mrf.mxu0
        %v308 = vadd.f32 %v209, %v307
        %309 = vmatmul.f32.gmra.mxu0 %v246
        %v310 = vpop.f32.mrf.mxu0
        %v311 = vadd.f32 %v209, %v310
        %312 = vmatmul.f32.gmra.mxu0 %v249
        %v313 = vpop.f32.mrf.mxu0
        %v314 = vadd.f32 %v209, %v313
        %315 = vmatmul.f32.gmra.mxu0 %v252
        %v316 = vpop.f32.mrf.mxu0
        %v317 = vadd.f32 %v209, %v316
        %318 = vmatmul.f32.gmra.mxu0 %v255
        %v319 = vpop.f32.mrf.mxu0
        %v320 = vadd.f32 %v209, %v319
        %321 = vmatmul.f32.gmra.mxu0 %v258
        %v322 = vpop.f32.mrf.mxu0
        %v323 = vadd.f32 %v209, %v322
        %324 = vdwg.mxu0
        %v325 = vmax.f32 %v278, 0.0
        %v326 = vmax.f32 %v281, 0.0
        %v327 = vmax.f32 %v284, 0.0
        %v328 = vmax.f32 %v287, 0.0
        %v329 = vmax.f32 %v290, 0.0
        %v330 = vmax.f32 %v293, 0.0
        %v331 = vmax.f32 %v296, 0.0
        %v332 = vmax.f32 %v299, 0.0
        %v333 = vmax.f32 %v302, 0.0
        %v334 = vmax.f32 %v305, 0.0
        %v335 = vmax.f32 %v308, 0.0
        %v336 = vmax.f32 %v311, 0.0
        %v337 = vmax.f32 %v314, 0.0
        %v338 = vmax.f32 %v317, 0.0
        %v339 = vmax.f32 %v320, 0.0
        %v340 = vmax.f32 %v323, 0.0
        %s341 = scalar_lea.vmem [#allocation2], 128
        %v342 = vld [vmem:[%s341] sm:$0xff]
        %v343 = vld [vmem:[%s341 + $0x8] sm:$0xff]
        %v344 = vld [vmem:[%s341 + $0x10] sm:$0xff]
        %v345 = vld [vmem:[%s341 + $0x18] sm:$0xff]
        %v346 = vld [vmem:[%s341 + $0x20] sm:$0xff]
        %v347 = vld [vmem:[%s341 + $0x28] sm:$0xff]
        %v348 = vld [vmem:[%s341 + $0x30] sm:$0xff]
        %v349 = vld [vmem:[%s341 + $0x38] sm:$0xff]
        %v350 = vld [vmem:[%s341 + $0x40] sm:$0xff]
        %v351 = vld [vmem:[%s341 + $0x48] sm:$0xff]
        %v352 = vld [vmem:[%s341 + $0x50] sm:$0xff]
        %v353 = vld [vmem:[%s341 + $0x58] sm:$0xff]
        %v354 = vld [vmem:[%s341 + $0x60] sm:$0xff]
        %v355 = vld [vmem:[%s341 + $0x68] sm:$0xff]
        %v356 = vld [vmem:[%s341 + $0x70] sm:$0xff]
        %v357 = vld [vmem:[%s341 + $0x78] sm:$0xff]
        %s358 = scalar_lea.vmem %s2, 1
        %v359 = vld [vmem:[%s358] sm:$0x1]
        %v361 = vperm.slane %v359, 0
        %363 = vmatpush.msra.mxu0 %v357
        %364 = vmatpush.msra.mxu0 %v356
        %365 = vmatpush.msra.mxu0 %v355
        %366 = vmatpush.msra.mxu0 %v354
        %367 = vmatpush.msra.mxu0 %v353
        %368 = vmatpush.msra.mxu0 %v352
        %369 = vmatpush.msra.mxu0 %v351
        %370 = vmatpush.msra.mxu0 %v350
        %371 = vmatpush.msra.mxu0 %v349
        %372 = vmatpush.msra.mxu0 %v348
        %373 = vmatpush.msra.mxu0 %v347
        %374 = vmatpush.msra.mxu0 %v346
        %375 = vmatpush.msra.mxu0 %v345
        %376 = vmatpush.msra.mxu0 %v344
        %377 = vmatpush.msra.mxu0 %v343
        %378 = vmatpush.msra.mxu0 %v342
        %379 = vmatmul.f32.gmra.mxu0 %v325
        %v380 = vpop.f32.mrf.mxu0
        %v381 = vadd.f32 %v361, %v380
        %382 = vmatmul.f32.gmra.mxu0 %v326
        %v383 = vpop.f32.mrf.mxu0
        %v384 = vadd.f32 %v361, %v383
        %385 = vmatmul.f32.gmra.mxu0 %v327
        %v386 = vpop.f32.mrf.mxu0
        %v387 = vadd.f32 %v361, %v386
        %388 = vmatmul.f32.gmra.mxu0 %v328
        %v389 = vpop.f32.mrf.mxu0
        %v390 = vadd.f32 %v361, %v389
        %391 = vmatmul.f32.gmra.mxu0 %v329
        %v392 = vpop.f32.mrf.mxu0
        %v393 = vadd.f32 %v361, %v392
        %394 = vmatmul.f32.gmra.mxu0 %v330
        %v395 = vpop.f32.mrf.mxu0
        %v396 = vadd.f32 %v361, %v395
        %397 = vmatmul.f32.gmra.mxu0 %v331
        %v398 = vpop.f32.mrf.mxu0
        %v399 = vadd.f32 %v361, %v398
        %400 = vmatmul.f32.gmra.mxu0 %v332
        %v401 = vpop.f32.mrf.mxu0
        %v402 = vadd.f32 %v361, %v401
        %403 = vmatmul.f32.gmra.mxu0 %v333
        %v404 = vpop.f32.mrf.mxu0
        %v405 = vadd.f32 %v361, %v404
        %406 = vmatmul.f32.gmra.mxu0 %v334
        %v407 = vpop.f32.mrf.mxu0
        %v408 = vadd.f32 %v361, %v407
        %409 = vmatmul.f32.gmra.mxu0 %v335
        %v410 = vpop.f32.mrf.mxu0
        %v411 = vadd.f32 %v361, %v410
        %412 = vmatmul.f32.gmra.mxu0 %v336
        %v413 = vpop.f32.mrf.mxu0
        %v414 = vadd.f32 %v361, %v413
        %415 = vmatmul.f32.gmra.mxu0 %v337
        %v416 = vpop.f32.mrf.mxu0
        %v417 = vadd.f32 %v361, %v416
        %418 = vmatmul.f32.gmra.mxu0 %v338
        %v419 = vpop.f32.mrf.mxu0
        %v420 = vadd.f32 %v361, %v419
        %421 = vmatmul.f32.gmra.mxu0 %v339
        %v422 = vpop.f32.mrf.mxu0
        %v423 = vadd.f32 %v361, %v422
        %424 = vmatmul.f32.gmra.mxu0 %v340
        %v425 = vpop.f32.mrf.mxu0
        %v426 = vadd.f32 %v361, %v425
        %427 = vdwg.mxu0
        %v428 = vtanh.pop %v381
        %v429 = vtanh.pop %v384
        %v430 = vtanh.pop %v387
        %v431 = vtanh.pop %v390
        %v432 = vtanh.pop %v393
        %v433 = vtanh.pop %v396
        %v434 = vtanh.pop %v399
        %v435 = vtanh.pop %v402
        %v436 = vtanh.pop %v405
        %v437 = vtanh.pop %v408
        %v438 = vtanh.pop %v411
        %v439 = vtanh.pop %v414
        %v440 = vtanh.pop %v417
        %v441 = vtanh.pop %v420
        %v442 = vtanh.pop %v423
        %v443 = vtanh.pop %v426
        %s444 = scalar_lea.vmem [#allocation2], 256
        %v445 = vld [vmem:[%s444] sm:$0xff]
        %v446 = vld [vmem:[%s444 + $0x8] sm:$0xff]
        %v447 = vld [vmem:[%s444 + $0x10] sm:$0xff]
        %v448 = vld [vmem:[%s444 + $0x18] sm:$0xff]
        %v449 = vld [vmem:[%s444 + $0x20] sm:$0xff]
        %v450 = vld [vmem:[%s444 + $0x28] sm:$0xff]
        %v451 = vld [vmem:[%s444 + $0x30] sm:$0xff]
        %v452 = vld [vmem:[%s444 + $0x38] sm:$0xff]
        %v453 = vld [vmem:[%s444 + $0x40] sm:$0xff]
        %v454 = vld [vmem:[%s444 + $0x48] sm:$0xff]
        %v455 = vld [vmem:[%s444 + $0x50] sm:$0xff]
        %v456 = vld [vmem:[%s444 + $0x58] sm:$0xff]
        %v457 = vld [vmem:[%s444 + $0x60] sm:$0xff]
        %v458 = vld [vmem:[%s444 + $0x68] sm:$0xff]
        %v459 = vld [vmem:[%s444 + $0x70] sm:$0xff]
        %v460 = vld [vmem:[%s444 + $0x78] sm:$0xff]
        %s461 = scalar_lea.vmem %s2, 2
        %v462 = vld [vmem:[%s461] sm:$0x1]
        %v464 = vperm.slane %v462, 0
        %466 = vmatpush.msra.mxu0 %v460
        %467 = vmatpush.msra.mxu0 %v459
        %468 = vmatpush.msra.mxu0 %v458
        %469 = vmatpush.msra.mxu0 %v457
        %470 = vmatpush.msra.mxu0 %v456
        %471 = vmatpush.msra.mxu0 %v455
        %472 = vmatpush.msra.mxu0 %v454
        %473 = vmatpush.msra.mxu0 %v453
        %474 = vmatpush.msra.mxu0 %v452
        %475 = vmatpush.msra.mxu0 %v451
        %476 = vmatpush.msra.mxu0 %v450
        %477 = vmatpush.msra.mxu0 %v449
        %478 = vmatpush.msra.mxu0 %v448
        %479 = vmatpush.msra.mxu0 %v447
        %480 = vmatpush.msra.mxu0 %v446
        %481 = vmatpush.msra.mxu0 %v445
        %482 = vmatmul.f32.gmra.mxu0 %v428
        %v483 = vpop.f32.mrf.mxu0
        %v484 = vadd.f32 %v464, %v483
        %485 = vmatmul.f32.gmra.mxu0 %v429
        %v486 = vpop.f32.mrf.mxu0
        %v487 = vadd.f32 %v464, %v486
        %488 = vmatmul.f32.gmra.mxu0 %v430
        %v489 = vpop.f32.mrf.mxu0
        %v490 = vadd.f32 %v464, %v489
        %491 = vmatmul.f32.gmra.mxu0 %v431
        %v492 = vpop.f32.mrf.mxu0
        %v493 = vadd.f32 %v464, %v492
        %494 = vmatmul.f32.gmra.mxu0 %v432
        %v495 = vpop.f32.mrf.mxu0
        %v496 = vadd.f32 %v464, %v495
        %497 = vmatmul.f32.gmra.mxu0 %v433
        %v498 = vpop.f32.mrf.mxu0
        %v499 = vadd.f32 %v464, %v498
        %500 = vmatmul.f32.gmra.mxu0 %v434
        %v501 = vpop.f32.mrf.mxu0
        %v502 = vadd.f32 %v464, %v501
        %503 = vmatmul.f32.gmra.mxu0 %v435
        %v504 = vpop.f32.mrf.mxu0
        %v505 = vadd.f32 %v464, %v504
        %506 = vmatmul.f32.gmra.mxu0 %v436
        %v507 = vpop.f32.mrf.mxu0
        %v508 = vadd.f32 %v464, %v507
        %509 = vmatmul.f32.gmra.mxu0 %v437
        %v510 = vpop.f32.mrf.mxu0
        %v511 = vadd.f32 %v464, %v510
        %512 = vmatmul.f32.gmra.mxu0 %v438
        %v513 = vpop.f32.mrf.mxu0
        %v514 = vadd.f32 %v464, %v513
        %515 = vmatmul.f32.gmra.mxu0 %v439
        %v516 = vpop.f32.mrf.mxu0
        %v517 = vadd.f32 %v464, %v516
        %518 = vmatmul.f32.gmra.mxu0 %v440
        %v519 = vpop.f32.mrf.mxu0
        %v520 = vadd.f32 %v464, %v519
        %521 = vmatmul.f32.gmra.mxu0 %v441
        %v522 = vpop.f32.mrf.mxu0
        %v523 = vadd.f32 %v464, %v522
        %524 = vmatmul.f32.gmra.mxu0 %v442
        %v525 = vpop.f32.mrf.mxu0
        %v526 = vadd.f32 %v464, %v525
        %527 = vmatmul.f32.gmra.mxu0 %v443
        %v528 = vpop.f32.mrf.mxu0
        %v529 = vadd.f32 %v464, %v528
        %530 = vdwg.mxu0
        %v531 = vxor.u32 %v484, 2147483648
        %v532 = vxor.u32 %v487, 2147483648
        %v533 = vxor.u32 %v490, 2147483648
        %v534 = vxor.u32 %v493, 2147483648
        %v535 = vxor.u32 %v496, 2147483648
        %v536 = vxor.u32 %v499, 2147483648
        %v537 = vxor.u32 %v502, 2147483648
        %v538 = vxor.u32 %v505, 2147483648
        %v539 = vxor.u32 %v508, 2147483648
        %v540 = vxor.u32 %v511, 2147483648
        %v541 = vxor.u32 %v514, 2147483648
        %v542 = vxor.u32 %v517, 2147483648
        %v543 = vxor.u32 %v520, 2147483648
        %v544 = vxor.u32 %v523, 2147483648
        %v545 = vxor.u32 %v526, 2147483648
        %v546 = vxor.u32 %v529, 2147483648
        %v547 = vmul.f32 %v531, 1.442695
        %v548 = vpow.pop %v547
        %v549 = vmul.f32 %v532, 1.442695
        %v550 = vpow.pop %v549
        %v551 = vmul.f32 %v533, 1.442695
        %v552 = vpow.pop %v551
        %v553 = vmul.f32 %v534, 1.442695
        %v554 = vpow.pop %v553
        %v555 = vmul.f32 %v535, 1.442695
        %v556 = vpow.pop %v555
        %v557 = vmul.f32 %v536, 1.442695
        %v558 = vpow.pop %v557
        %v559 = vmul.f32 %v537, 1.442695
        %v560 = vpow.pop %v559
        %v561 = vmul.f32 %v538, 1.442695
        %v562 = vpow.pop %v561
        %v563 = vmul.f32 %v539, 1.442695
        %v564 = vpow.pop %v563
        %v565 = vmul.f32 %v540, 1.442695
        %v566 = vpow.pop %v565
        %v567 = vmul.f32 %v541, 1.442695
        %v568 = vpow.pop %v567
        %v569 = vmul.f32 %v542, 1.442695
        %v570 = vpow.pop %v569
        %v571 = vmul.f32 %v543, 1.442695
        %v572 = vpow.pop %v571
        %v573 = vmul.f32 %v544, 1.442695
        %v574 = vpow.pop %v573
        %v575 = vmul.f32 %v545, 1.442695
        %v576 = vpow.pop %v575
        %v577 = vmul.f32 %v546, 1.442695
        %v578 = vpow.pop %v577
        %v579 = vadd.f32 %v548, 1.0
        %v580 = vadd.f32 %v550, 1.0
        %v581 = vadd.f32 %v552, 1.0
        %v582 = vadd.f32 %v554, 1.0
        %v583 = vadd.f32 %v556, 1.0
        %v584 = vadd.f32 %v558, 1.0
        %v585 = vadd.f32 %v560, 1.0
        %v586 = vadd.f32 %v562, 1.0
        %v587 = vadd.f32 %v564, 1.0
        %v588 = vadd.f32 %v566, 1.0
        %v589 = vadd.f32 %v568, 1.0
        %v590 = vadd.f32 %v570, 1.0
        %v591 = vadd.f32 %v572, 1.0
        %v592 = vadd.f32 %v574, 1.0
        %v593 = vadd.f32 %v576, 1.0
        %v594 = vadd.f32 %v578, 1.0
        %v595 = vrcp.pop %v579
        %v596 = vmul.f32 %v579, %v595
        %v597 = vsub.f32 1.0, %v596
        %v598 = vmul.f32 %v595, %v597
        %v599 = vadd.f32 %v595, %v598
        %vm600 = vweird.f32 %v579
        %vm601 = vweird.f32 %v595
        %vm602 = vmor %vm600, %vm601
        %v603 = vsel %vm602, %v595, %v599
        %v604 = vand.u32 2147483647, %v579
        %vm605 = vcmp.eq.f32.partialorder %v604, 8.507059e+37
        %v606 = vand.u32 %v579, 2147483648
        %v607 = vor.u32 1.1754944e-38, %v606
        %v608 = vsel %vm605, %v607, %v603
        %v609 = vmul.f32 1.0, %v608
        %v610 = vrcp.pop %v580
        %v611 = vmul.f32 %v580, %v610
        %v612 = vsub.f32 1.0, %v611
        %v613 = vmul.f32 %v610, %v612
        %v614 = vadd.f32 %v610, %v613
        %vm615 = vweird.f32 %v580
        %vm616 = vweird.f32 %v610
        %vm617 = vmor %vm615, %vm616
        %v618 = vsel %vm617, %v610, %v614
        %v619 = vand.u32 2147483647, %v580
        %vm620 = vcmp.eq.f32.partialorder %v619, 8.507059e+37
        %v621 = vand.u32 %v580, 2147483648
        %v622 = vor.u32 1.1754944e-38, %v621
        %v623 = vsel %vm620, %v622, %v618
        %v624 = vmul.f32 1.0, %v623
        %v625 = vrcp.pop %v581
        %v626 = vmul.f32 %v581, %v625
        %v627 = vsub.f32 1.0, %v626
        %v628 = vmul.f32 %v625, %v627
        %v629 = vadd.f32 %v625, %v628
        %vm630 = vweird.f32 %v581
        %vm631 = vweird.f32 %v625
        %vm632 = vmor %vm630, %vm631
        %v633 = vsel %vm632, %v625, %v629
        %v634 = vand.u32 2147483647, %v581
        %vm635 = vcmp.eq.f32.partialorder %v634, 8.507059e+37
        %v636 = vand.u32 %v581, 2147483648
        %v637 = vor.u32 1.1754944e-38, %v636
        %v638 = vsel %vm635, %v637, %v633
        %v639 = vmul.f32 1.0, %v638
        %v640 = vrcp.pop %v582
        %v641 = vmul.f32 %v582, %v640
        %v642 = vsub.f32 1.0, %v641
        %v643 = vmul.f32 %v640, %v642
        %v644 = vadd.f32 %v640, %v643
        %vm645 = vweird.f32 %v582
        %vm646 = vweird.f32 %v640
        %vm647 = vmor %vm645, %vm646
        %v648 = vsel %vm647, %v640, %v644
        %v649 = vand.u32 2147483647, %v582
        %vm650 = vcmp.eq.f32.partialorder %v649, 8.507059e+37
        %v651 = vand.u32 %v582, 2147483648
        %v652 = vor.u32 1.1754944e-38, %v651
        %v653 = vsel %vm650, %v652, %v648
        %v654 = vmul.f32 1.0, %v653
        %v655 = vrcp.pop %v583
        %v656 = vmul.f32 %v583, %v655
        %v657 = vsub.f32 1.0, %v656
        %v658 = vmul.f32 %v655, %v657
        %v659 = vadd.f32 %v655, %v658
        %vm660 = vweird.f32 %v583
        %vm661 = vweird.f32 %v655
        %vm662 = vmor %vm660, %vm661
        %v663 = vsel %vm662, %v655, %v659
        %v664 = vand.u32 2147483647, %v583
        %vm665 = vcmp.eq.f32.partialorder %v664, 8.507059e+37
        %v666 = vand.u32 %v583, 2147483648
        %v667 = vor.u32 1.1754944e-38, %v666
        %v668 = vsel %vm665, %v667, %v663
        %v669 = vmul.f32 1.0, %v668
        %v670 = vrcp.pop %v584
        %v671 = vmul.f32 %v584, %v670
        %v672 = vsub.f32 1.0, %v671
        %v673 = vmul.f32 %v670, %v672
        %v674 = vadd.f32 %v670, %v673
        %vm675 = vweird.f32 %v584
        %vm676 = vweird.f32 %v670
        %vm677 = vmor %vm675, %vm676
        %v678 = vsel %vm677, %v670, %v674
        %v679 = vand.u32 2147483647, %v584
        %vm680 = vcmp.eq.f32.partialorder %v679, 8.507059e+37
        %v681 = vand.u32 %v584, 2147483648
        %v682 = vor.u32 1.1754944e-38, %v681
        %v683 = vsel %vm680, %v682, %v678
        %v684 = vmul.f32 1.0, %v683
        %v685 = vrcp.pop %v585
        %v686 = vmul.f32 %v585, %v685
        %v687 = vsub.f32 1.0, %v686
        %v688 = vmul.f32 %v685, %v687
        %v689 = vadd.f32 %v685, %v688
        %vm690 = vweird.f32 %v585
        %vm691 = vweird.f32 %v685
        %vm692 = vmor %vm690, %vm691
        %v693 = vsel %vm692, %v685, %v689
        %v694 = vand.u32 2147483647, %v585
        %vm695 = vcmp.eq.f32.partialorder %v694, 8.507059e+37
        %v696 = vand.u32 %v585, 2147483648
        %v697 = vor.u32 1.1754944e-38, %v696
        %v698 = vsel %vm695, %v697, %v693
        %v699 = vmul.f32 1.0, %v698
        %v700 = vrcp.pop %v586
        %v701 = vmul.f32 %v586, %v700
        %v702 = vsub.f32 1.0, %v701
        %v703 = vmul.f32 %v700, %v702
        %v704 = vadd.f32 %v700, %v703
        %vm705 = vweird.f32 %v586
        %vm706 = vweird.f32 %v700
        %vm707 = vmor %vm705, %vm706
        %v708 = vsel %vm707, %v700, %v704
        %v709 = vand.u32 2147483647, %v586
        %vm710 = vcmp.eq.f32.partialorder %v709, 8.507059e+37
        %v711 = vand.u32 %v586, 2147483648
        %v712 = vor.u32 1.1754944e-38, %v711
        %v713 = vsel %vm710, %v712, %v708
        %v714 = vmul.f32 1.0, %v713
        %v715 = vrcp.pop %v587
        %v716 = vmul.f32 %v587, %v715
        %v717 = vsub.f32 1.0, %v716
        %v718 = vmul.f32 %v715, %v717
        %v719 = vadd.f32 %v715, %v718
        %vm720 = vweird.f32 %v587
        %vm721 = vweird.f32 %v715
        %vm722 = vmor %vm720, %vm721
        %v723 = vsel %vm722, %v715, %v719
        %v724 = vand.u32 2147483647, %v587
        %vm725 = vcmp.eq.f32.partialorder %v724, 8.507059e+37
        %v726 = vand.u32 %v587, 2147483648
        %v727 = vor.u32 1.1754944e-38, %v726
        %v728 = vsel %vm725, %v727, %v723
        %v729 = vmul.f32 1.0, %v728
        %v730 = vrcp.pop %v588
        %v731 = vmul.f32 %v588, %v730
        %v732 = vsub.f32 1.0, %v731
        %v733 = vmul.f32 %v730, %v732
        %v734 = vadd.f32 %v730, %v733
        %vm735 = vweird.f32 %v588
        %vm736 = vweird.f32 %v730
        %vm737 = vmor %vm735, %vm736
        %v738 = vsel %vm737, %v730, %v734
        %v739 = vand.u32 2147483647, %v588
        %vm740 = vcmp.eq.f32.partialorder %v739, 8.507059e+37
        %v741 = vand.u32 %v588, 2147483648
        %v742 = vor.u32 1.1754944e-38, %v741
        %v743 = vsel %vm740, %v742, %v738
        %v744 = vmul.f32 1.0, %v743
        %v745 = vrcp.pop %v589
        %v746 = vmul.f32 %v589, %v745
        %v747 = vsub.f32 1.0, %v746
        %v748 = vmul.f32 %v745, %v747
        %v749 = vadd.f32 %v745, %v748
        %vm750 = vweird.f32 %v589
        %vm751 = vweird.f32 %v745
        %vm752 = vmor %vm750, %vm751
        %v753 = vsel %vm752, %v745, %v749
        %v754 = vand.u32 2147483647, %v589
        %vm755 = vcmp.eq.f32.partialorder %v754, 8.507059e+37
        %v756 = vand.u32 %v589, 2147483648
        %v757 = vor.u32 1.1754944e-38, %v756
        %v758 = vsel %vm755, %v757, %v753
        %v759 = vmul.f32 1.0, %v758
        %v760 = vrcp.pop %v590
        %v761 = vmul.f32 %v590, %v760
        %v762 = vsub.f32 1.0, %v761
        %v763 = vmul.f32 %v760, %v762
        %v764 = vadd.f32 %v760, %v763
        %vm765 = vweird.f32 %v590
        %vm766 = vweird.f32 %v760
        %vm767 = vmor %vm765, %vm766
        %v768 = vsel %vm767, %v760, %v764
        %v769 = vand.u32 2147483647, %v590
        %vm770 = vcmp.eq.f32.partialorder %v769, 8.507059e+37
        %v771 = vand.u32 %v590, 2147483648
        %v772 = vor.u32 1.1754944e-38, %v771
        %v773 = vsel %vm770, %v772, %v768
        %v774 = vmul.f32 1.0, %v773
        %v775 = vrcp.pop %v591
        %v776 = vmul.f32 %v591, %v775
        %v777 = vsub.f32 1.0, %v776
        %v778 = vmul.f32 %v775, %v777
        %v779 = vadd.f32 %v775, %v778
        %vm780 = vweird.f32 %v591
        %vm781 = vweird.f32 %v775
        %vm782 = vmor %vm780, %vm781
        %v783 = vsel %vm782, %v775, %v779
        %v784 = vand.u32 2147483647, %v591
        %vm785 = vcmp.eq.f32.partialorder %v784, 8.507059e+37
        %v786 = vand.u32 %v591, 2147483648
        %v787 = vor.u32 1.1754944e-38, %v786
        %v788 = vsel %vm785, %v787, %v783
        %v789 = vmul.f32 1.0, %v788
        %v790 = vrcp.pop %v592
        %v791 = vmul.f32 %v592, %v790
        %v792 = vsub.f32 1.0, %v791
        %v793 = vmul.f32 %v790, %v792
        %v794 = vadd.f32 %v790, %v793
        %vm795 = vweird.f32 %v592
        %vm796 = vweird.f32 %v790
        %vm797 = vmor %vm795, %vm796
        %v798 = vsel %vm797, %v790, %v794
        %v799 = vand.u32 2147483647, %v592
        %vm800 = vcmp.eq.f32.partialorder %v799, 8.507059e+37
        %v801 = vand.u32 %v592, 2147483648
        %v802 = vor.u32 1.1754944e-38, %v801
        %v803 = vsel %vm800, %v802, %v798
        %v804 = vmul.f32 1.0, %v803
        %v805 = vrcp.pop %v593
        %v806 = vmul.f32 %v593, %v805
        %v807 = vsub.f32 1.0, %v806
        %v808 = vmul.f32 %v805, %v807
        %v809 = vadd.f32 %v805, %v808
        %vm810 = vweird.f32 %v593
        %vm811 = vweird.f32 %v805
        %vm812 = vmor %vm810, %vm811
        %v813 = vsel %vm812, %v805, %v809
        %v814 = vand.u32 2147483647, %v593
        %vm815 = vcmp.eq.f32.partialorder %v814, 8.507059e+37
        %v816 = vand.u32 %v593, 2147483648
        %v817 = vor.u32 1.1754944e-38, %v816
        %v818 = vsel %vm815, %v817, %v813
        %v819 = vmul.f32 1.0, %v818
        %v820 = vrcp.pop %v594
        %v821 = vmul.f32 %v594, %v820
        %v822 = vsub.f32 1.0, %v821
        %v823 = vmul.f32 %v820, %v822
        %v824 = vadd.f32 %v820, %v823
        %vm825 = vweird.f32 %v594
        %vm826 = vweird.f32 %v820
        %vm827 = vmor %vm825, %vm826
        %v828 = vsel %vm827, %v820, %v824
        %v829 = vand.u32 2147483647, %v594
        %vm830 = vcmp.eq.f32.partialorder %v829, 8.507059e+37
        %v831 = vand.u32 %v594, 2147483648
        %v832 = vor.u32 1.1754944e-38, %v831
        %v833 = vsel %vm830, %v832, %v828
        %v834 = vmul.f32 1.0, %v833
        %835 = vst [vmem:[%s181] sm:$0xff] %v609
        %836 = vst [vmem:[%s181 + $0x8] sm:$0xff] %v624
        %837 = vst [vmem:[%s181 + $0x10] sm:$0xff] %v639
        %838 = vst [vmem:[%s181 + $0x18] sm:$0xff] %v654
        %839 = vst [vmem:[%s181 + $0x20] sm:$0xff] %v669
        %840 = vst [vmem:[%s181 + $0x28] sm:$0xff] %v684
        %841 = vst [vmem:[%s181 + $0x30] sm:$0xff] %v699
        %842 = vst [vmem:[%s181 + $0x38] sm:$0xff] %v714
        %843 = vst [vmem:[%s181 + $0x40] sm:$0xff] %v729
        %844 = vst [vmem:[%s181 + $0x48] sm:$0xff] %v744
        %845 = vst [vmem:[%s181 + $0x50] sm:$0xff] %v759
        %846 = vst [vmem:[%s181 + $0x58] sm:$0xff] %v774
        %847 = vst [vmem:[%s181 + $0x60] sm:$0xff] %v789
        %848 = vst [vmem:[%s181 + $0x68] sm:$0xff] %v804
        %849 = vst [vmem:[%s181 + $0x70] sm:$0xff] %v819
        %850 = vst [vmem:[%s181 + $0x78] sm:$0xff] %v834
        %s851 = sand.u32 %s94, 1
        %s852 = scalar_lea.sflag [#allocation4], %s851
        %s853 = sand.u32 %s94, 1
        %s854 = smul.addr %s853, 128
        %s855 = scalar_lea.vmem [#allocation5], %s854
        // Predicated region
        $region37: #{tpu_custom_call.1} parent=31 // pred_check
          %p856 = pneg %p104
        $region38: #{tpu_custom_call.1} parent=31 // pred_check_branch
          %858 = sbr.rel (%p856) target = $region40
        $region39: #{tpu_custom_call.1} parent=31 // pred_region
          %s859 = smul.u32 16, %s18
          %861 = vsyncadd %s852, 0
          %s862 = smul.addr %s859, 8
          %s863 = scalar_lea.hbm %s3, %s862
          %s864 = sshll.u32 %s855, 4
          %s865 = int_to_ptr.vmem [resolvable:$true] %s864
          %s866 = sshll.u32 %s863, 4
          %s867 = int_to_ptr.hbm [resolvable:$true] %s866
          %872 = dma.vmem_to_hbm [thread:$0]  %s865, 2048, %s867, %s852, 128, 128, 8
        $region40: #{tpu_custom_call.1} parent=31 // pred_fallthru
          _
      $region32: #{tpu_custom_call.1} parent=5 // pred_fallthru
        _
      %p873 = scmp.le.s32.totalorder 2, %s13
      // Predicated region
      $region41: #{tpu_custom_call.1} parent=5 // pred_check
        %p874 = pneg %p873
      $region42: #{tpu_custom_call.1} parent=5 // pred_check_branch
        %876 = sbr.rel (%p874) target = $region44
      $region43: #{tpu_custom_call.1} parent=5 // pred_region
        %s877 = ssub.s32 %s13, 2
        // Predicated region
        $region45: #{tpu_custom_call.1} parent=43 // pred_check
          %p878 = pneg %p110
        $region46: #{tpu_custom_call.1} parent=43 // pred_check_branch
          %880 = sbr.rel (%p878) target = $region48
        $region47: #{tpu_custom_call.1} parent=43 // pred_region
          %s881 = sand.u32 %s95, 1
          %s882 = scalar_lea.sflag [#allocation4], %s881
          %s883 = sand.u32 %s95, 1
          %s884 = smul.addr %s883, 128
          %s885 = scalar_lea.vmem [#allocation5], %s884
          %887 = dma.done %s882, 2048
        $region48: #{tpu_custom_call.1} parent=43 // pred_fallthru
          _
      $region44: #{tpu_custom_call.1} parent=5 // pred_fallthru
        _
    $region6: #{tpu_custom_call.1} parent=1 // loop_footer
      %s17 = sadd.s32 1, %s13
    $region7: #{tpu_custom_call.1} parent=1 // loop_footer_branch
      %12 = sbr.rel target = $region3
    $region8: #{tpu_custom_call.1} parent=1 // loop_exit
      _
    %888 = vsyncpa [#allocation3], 1
    %s889 = scalar_lea.sflag [#allocation3], 1
    %890 = vsyncpa %s889, 1
    %891 = vsyncpa [#allocation4], 1
    %s892 = scalar_lea.sflag [#allocation4], 1
    %893 = vsyncpa %s892, 1

</llo_original>
